<compile_context>
chip_gen: v5e
topology: v5e:2x2
jax: 0.10.0
libtpu: 0.0.40
codegen_flags: <defaults>
</compile_context>

<pallas_src>
import functools

import jax
import jax.numpy as jnp
from jax import lax
from jax.experimental import pallas as pl
from jax.experimental.pallas import tpu as pltpu


# ----------------------------- kernels ---------------------------------------


def _layernorm_kernel(x_ref, g_ref, b_ref, o_ref, *, inv_d, inv_dm1):
    # x_ref: (tile_rows, D); g_ref/b_ref: (1, D) f32. One-pass stats over lanes.
    x = x_ref[...].astype(jnp.float32)
    s = jnp.sum(x, axis=-1, keepdims=True)
    ss = jnp.sum(x * x, axis=-1, keepdims=True)
    mean = s * jnp.float32(inv_d)
    var = (ss - s * mean) * jnp.float32(inv_dm1)        # unbiased (divide by D-1)
    inv = lax.rsqrt(var + jnp.float32(1e-12))           # EUP slot
    y = (x - mean) * inv                                 # single (rows, D) temp live
    o_ref[...] = (y * g_ref[...] + b_ref[...]).astype(o_ref.dtype)


def _layernorm_packed_kernel(x_ref, g_ref, b_ref, seg_ref, o_ref, *, inv_d, inv_dm1):
    # Lane-dense path: each 128-lane row holds k = 128//D independent rows.
    # seg_ref: (128, 128) f32 segment-sum matrix; x @ seg broadcasts each segment's sum
    # back to all D lanes of that segment (reduction + broadcast on the idle MXU).
    x = x_ref[...].astype(jnp.float32)
    seg = seg_ref[...]
    s = jnp.dot(x, seg, preferred_element_type=jnp.float32)
    ss = jnp.dot(x * x, seg, preferred_element_type=jnp.float32)
    mean = s * jnp.float32(inv_d)
    var = (ss - s * mean) * jnp.float32(inv_dm1)
    inv = lax.rsqrt(var + jnp.float32(1e-12))
    y = (x - mean) * inv
    o_ref[...] = (y * g_ref[...] + b_ref[...]).astype(o_ref.dtype)


# ----------------------------- sizing helpers ---------------------------------


def _vmem_capacity_bytes():
    """Physical VMEM per TensorCore; conservative (v7x-sized) fallback."""
    try:
        info = pltpu.get_tpu_info()
        for name in ("vmem_capacity_bytes", "vmem_bytes", "vmem_size_bytes"):
            cap = getattr(info, name, None)
            if cap:
                return int(cap)
    except Exception:
        pass
    return 64 * 1024 * 1024


def _choose_tile_rows(R, D, dtype, vmem_cap):
    """Row tile: ~VMEM/10 bytes of x per tile (≈12.8 MiB on 128 MiB parts, ≈6.4 MiB on
    v7x), multiple of the sublane pack, and >= 2 grid steps when possible so both v7x
    TensorCores get work."""
    itemsize = jnp.dtype(dtype).itemsize
    row_mult = 8 if itemsize >= 4 else (16 if itemsize == 2 else 32)
    if R <= row_mult:
        return int(R)  # single full-extent block (block dims == array dims)
    target_bytes = max(4 * 1024 * 1024, vmem_cap // 10)
    rows = max(row_mult, target_bytes // max(1, D * itemsize))
    rows = (rows // row_mult) * row_mult
    rows = min(rows, ((R + row_mult - 1) // row_mult) * row_mult)
    if rows >= R:  # would give a 1-step grid -> split so the row axis can shard (v7x)
        half = -(-R // 2)
        rows = ((half + row_mult - 1) // row_mult) * row_mult
    return int(max(row_mult, rows))


# ----------------------------- wrapper -----------------------------------------


def layer_norm(x, g, b, *, tile_rows=None):
    """LayerNorm over the last axis. x: (..., D); g, b: (D,).
    Matches the torch module: mean over dim=-1, unbiased variance, eps=1e-12."""
    orig_shape = x.shape
    D = int(orig_shape[-1])
    x2 = x.reshape(-1, D)
    R = x2.shape[0]

    g32 = g.astype(jnp.float32)
    b32 = b.astype(jnp.float32)

    inv_d = 1.0 / D
    inv_dm1 = (1.0 / (D - 1)) if D > 1 else 0.0  # D==1: torch gives NaN; we emit b

    vmem_cap = _vmem_capacity_bytes()
    vmem_limit = int(vmem_cap * 3 // 4)  # ~48 MiB on v7x, ~96 MiB on v5e/v6e

    compiler_params = pltpu.CompilerParams(
        dimension_semantics=("parallel",),
        vmem_limit_bytes=vmem_limit,
    )

    use_packed = (1 < D < 128) and (128 % D == 0)

    if use_packed:
        # Lane-dense packing: k rows per 128-lane row -> full-lane loads/stores.
        k = 128 // D
        P = k * D  # == 128
        Rp = -(-R // k) * k
        if Rp != R:
            # TODO(synk): trailing-row pad copies x once; only hit when R % k != 0.
            x2 = jnp.concatenate(
                [x2, jnp.zeros((Rp - R, D), dtype=x2.dtype)], axis=0)
        Rk = Rp // k
        xp = x2.reshape(Rk, P)
        gk = jnp.tile(g32, (k,)).reshape(1, P)
        bk = jnp.tile(b32, (k,)).reshape(1, P)
        lane = jnp.arange(P, dtype=jnp.int32)
        seg = (lane[:, None] // D == lane[None, :] // D).astype(jnp.float32)

        tr = tile_rows if tile_rows is not None else _choose_tile_rows(
            Rk, P, x.dtype, vmem_cap)
        grid = (pl.cdiv(Rk, tr),)

        out = pl.pallas_call(
            functools.partial(_layernorm_packed_kernel, inv_d=inv_d, inv_dm1=inv_dm1),
            out_shape=jax.ShapeDtypeStruct((Rk, P), x.dtype),
            grid_spec=pltpu.PrefetchScalarGridSpec(
                num_scalar_prefetch=0,
                grid=grid,
                in_specs=[
                    pl.BlockSpec((tr, P), lambda i: (i, 0)),
                    pl.BlockSpec((1, P), lambda i: (0, 0)),
                    pl.BlockSpec((1, P), lambda i: (0, 0)),
                    pl.BlockSpec((P, P), lambda i: (0, 0)),
                ],
                out_specs=pl.BlockSpec((tr, P), lambda i: (i, 0)),
            ),
            compiler_params=compiler_params,
        )(xp, gk, bk, seg)
        out = out.reshape(Rp, D)[:R]
    else:
        tr = tile_rows if tile_rows is not None else _choose_tile_rows(
            R, D, x.dtype, vmem_cap)
        grid = (pl.cdiv(R, tr),)  # partial last block handled by masked writes

        out = pl.pallas_call(
            functools.partial(_layernorm_kernel, inv_d=inv_d, inv_dm1=inv_dm1),
            out_shape=jax.ShapeDtypeStruct((R, D), x.dtype),
            grid_spec=pltpu.PrefetchScalarGridSpec(
                num_scalar_prefetch=0,
                grid=grid,
                in_specs=[
                    pl.BlockSpec((tr, D), lambda i: (i, 0)),
                    pl.BlockSpec((1, D), lambda i: (0, 0)),
                    pl.BlockSpec((1, D), lambda i: (0, 0)),
                ],
                out_specs=pl.BlockSpec((tr, D), lambda i: (i, 0)),
            ),
            compiler_params=compiler_params,
        )(x2, g32.reshape(1, D), b32.reshape(1, D))

    return out.reshape(orig_shape)


# ----------------------------- reference & tests --------------------------------


def _ref_layer_norm(x, g, b):
    D = x.shape[-1]
    mean = jnp.mean(x, axis=-1, keepdims=True)
    var = jnp.sum((x - mean) ** 2, axis=-1, keepdims=True) / (D - 1)  # unbiased (torch.var)
    return (x - mean) * g / jnp.sqrt(var + 1e-12) + b


if __name__ == "__main__":
    key = jax.random.PRNGKey(0)

    # 1) Module's natural small shape (D=32 < 128 -> lane-dense packed path).
    batch, seq, d_model = 2, 8, 32
    x = jax.random.normal(key, (batch, seq, d_model), dtype=jnp.float32)
    g = jnp.ones((d_model,), dtype=jnp.float32)   # nn.Parameter(torch.ones(d_model))
    b = jnp.zeros((d_model,), dtype=jnp.float32)  # nn.Parameter(torch.zeros(d_model))
    y = jax.block_until_ready(layer_norm(x, g, b))
    ref = _ref_layer_norm(x, g, b)
    assert jnp.allclose(y, ref, atol=5e-5, rtol=5e-5), "mismatch (packed path)"

    # 2) D=128, row count not a multiple of the tile -> standard path, >=2 grid steps,
    #    masked partial last block.
    k2 = jax.random.PRNGKey(0)
    x2 = jax.random.normal(k2, (3, 5, 128), dtype=jnp.float32)
    g2 = jnp.ones((128,), dtype=jnp.float32)
    b2 = jnp.zeros((128,), dtype=jnp.float32)
    y2 = jax.block_until_ready(layer_norm(x2, g2, b2))
    ref2 = _ref_layer_norm(x2, g2, b2)
    assert jnp.allclose(y2, ref2, atol=5e-5, rtol=5e-5), "mismatch (standard path)"

    # 3) D=64 with row count not a multiple of k -> packed path with trailing-row pad.
    k3 = jax.random.PRNGKey(0)
    x3 = jax.random.normal(k3, (1, 5, 64), dtype=jnp.float32)
    g3 = jnp.ones((64,), dtype=jnp.float32)
    b3 = jnp.zeros((64,), dtype=jnp.float32)
    y3 = jax.block_until_ready(layer_norm(x3, g3, b3))
    ref3 = _ref_layer_norm(x3, g3, b3)
    assert jnp.allclose(y3, ref3, atol=5e-5, rtol=5e-5), "mismatch (packed+pad path)"

    print("KERNEL_OK")
</pallas_src>

<mosaic_0001>
module attributes {stable_mosaic.version = 11 : i64} {
  func.func @_layernorm_packed_kernel(%arg0: i32, %arg1: memref<4x128xf32, #tpu.memory_space<vmem>>, %arg2: memref<1x128xf32, #tpu.memory_space<vmem>>, %arg3: memref<1x128xf32, #tpu.memory_space<vmem>>, %arg4: memref<128x128xf32, #tpu.memory_space<vmem>>, %arg5: memref<4x128xf32, #tpu.memory_space<vmem>>) attributes {dimension_semantics = [#tpu.dimension_semantics<parallel>], iteration_bounds = array<i64: 1>, scalar_prefetch = 0 : i64, scratch_operands = 0 : i64, tpu.core_type = #tpu.core_type<tc>, window_params = [{transform_indices = @transform_0, window_bounds = array<i64: 4, 128>}, {pipeline_mode = #tpu.pipeline_mode<synchronous>, transform_indices = @transform_1, window_bounds = array<i64: 1, 128>}, {pipeline_mode = #tpu.pipeline_mode<synchronous>, transform_indices = @transform_2, window_bounds = array<i64: 1, 128>}, {pipeline_mode = #tpu.pipeline_mode<synchronous>, transform_indices = @transform_3, window_bounds = array<i64: 128, 128>}, {transform_indices = @transform_4, window_bounds = array<i64: 4, 128>}]} {
    %c0 = arith.constant 0 : index
    %c0_0 = arith.constant 0 : index
    %0 = vector.load %arg1[%c0, %c0_0] : memref<4x128xf32, #tpu.memory_space<vmem>>, vector<4x128xf32>
    %c0_1 = arith.constant 0 : index
    %c0_2 = arith.constant 0 : index
    %1 = vector.load %arg4[%c0_1, %c0_2] : memref<128x128xf32, #tpu.memory_space<vmem>>, vector<128x128xf32>
    %cst = arith.constant dense<0.000000e+00> : vector<4x128xf32>
    %2 = tpu.matmul %0, %1, %cst {dimension_numbers = #tpu.dot_dimension_numbers<[1], [0], [0], [1], [0, 0, 1, 1], [], []>} : vector<4x128xf32>, vector<128x128xf32>, vector<4x128xf32> -> vector<4x128xf32>
    %3 = arith.mulf %0, %0 : vector<4x128xf32>
    %cst_3 = arith.constant dense<0.000000e+00> : vector<4x128xf32>
    %4 = tpu.matmul %3, %1, %cst_3 {dimension_numbers = #tpu.dot_dimension_numbers<[1], [0], [0], [1], [0, 0, 1, 1], [], []>} : vector<4x128xf32>, vector<128x128xf32>, vector<4x128xf32> -> vector<4x128xf32>
    %cst_4 = arith.constant 3.125000e-02 : f32
    %5 = vector.broadcast %cst_4 : f32 to vector<4x128xf32>
    %6 = arith.mulf %2, %5 : vector<4x128xf32>
    %7 = arith.mulf %2, %6 : vector<4x128xf32>
    %8 = arith.subf %4, %7 : vector<4x128xf32>
    %cst_5 = arith.constant 0.0322580636 : f32
    %9 = vector.broadcast %cst_5 : f32 to vector<4x128xf32>
    %10 = arith.mulf %8, %9 : vector<4x128xf32>
    %cst_6 = arith.constant 9.99999996E-13 : f32
    %11 = vector.broadcast %cst_6 : f32 to vector<4x128xf32>
    %12 = arith.addf %10, %11 : vector<4x128xf32>
    %13 = math.rsqrt %12 : vector<4x128xf32>
    %14 = arith.subf %0, %6 : vector<4x128xf32>
    %15 = arith.mulf %14, %13 : vector<4x128xf32>
    %c0_7 = arith.constant 0 : index
    %c0_8 = arith.constant 0 : index
    %16 = vector.load %arg2[%c0_7, %c0_8] : memref<1x128xf32, #tpu.memory_space<vmem>>, vector<1x128xf32>
    %17 = vector.broadcast %16 : vector<1x128xf32> to vector<4x128xf32>
    %18 = arith.mulf %15, %17 : vector<4x128xf32>
    %c0_9 = arith.constant 0 : index
    %c0_10 = arith.constant 0 : index
    %19 = vector.load %arg3[%c0_9, %c0_10] : memref<1x128xf32, #tpu.memory_space<vmem>>, vector<1x128xf32>
    %20 = vector.broadcast %19 : vector<1x128xf32> to vector<4x128xf32>
    %21 = arith.addf %18, %20 : vector<4x128xf32>
    %c0_11 = arith.constant 0 : index
    %c0_12 = arith.constant 0 : index
    %22 = vector.load %arg5[%c0_11, %c0_12] : memref<4x128xf32, #tpu.memory_space<vmem>>, vector<4x128xf32>
    tpu.vector_store %arg5[%c0_11, %c0_12], %21 {strides = array<i32>} : memref<4x128xf32, #tpu.memory_space<vmem>>, vector<4x128xf32>,
    return
  }
  func.func @transform_0(%arg0: i32) -> (i32, i32) {
    %c0_i32 = arith.constant 0 : i32
    %c0_i32_0 = arith.constant 0 : i32
    return %arg0, %c0_i32 : i32, i32
  }
  func.func @transform_1(%arg0: i32) -> (i32, i32) {
    %c0_i32 = arith.constant 0 : i32
    %c0_i32_0 = arith.constant 0 : i32
    %c0_i32_1 = arith.constant 0 : i32
    return %c0_i32, %c0_i32_0 : i32, i32
  }
  func.func @transform_2(%arg0: i32) -> (i32, i32) {
    %c0_i32 = arith.constant 0 : i32
    %c0_i32_0 = arith.constant 0 : i32
    %c0_i32_1 = arith.constant 0 : i32
    return %c0_i32, %c0_i32_0 : i32, i32
  }
  func.func @transform_3(%arg0: i32) -> (i32, i32) {
    %c0_i32 = arith.constant 0 : i32
    %c0_i32_0 = arith.constant 0 : i32
    %c0_i32_1 = arith.constant 0 : i32
    return %c0_i32, %c0_i32_0 : i32, i32
  }
  func.func @transform_4(%arg0: i32) -> (i32, i32) {
    %c0_i32 = arith.constant 0 : i32
    %c0_i32_0 = arith.constant 0 : i32
    return %arg0, %c0_i32 : i32, i32
  }
}

</mosaic_0001>

<llo_original>
// kernel: tpu_custom_call.1
$region0: #{tpu_custom_call.1}
  #allocation0 [shape = 'u32[]', space=smem, size = 0x4, offset = 0x4, fixed_abs, tag = 'smem constant byte address 0x4 - core index']
  #allocation1 [shape = 'u32[72,128]{1,0:T(1,128)}', space=vmem, size = 0x9000, scoped, tag = 'internal scratch']
  %s0 = inlined_call_operand.hbm [shape: f32[4,128], index: 0, kind: input, shape index: {}]
  %s1 = inlined_call_operand.hbm [shape: f32[1,128], index: 1, kind: input, shape index: {}]
  %s2 = inlined_call_operand.vmem [shape: f32[1,128], index: 2, kind: input, shape index: {}]
  %s3 = inlined_call_operand.hbm [shape: f32[128,128], index: 3, kind: input, shape index: {}]
  %s4 = inlined_call_operand.hbm [shape: f32[4,128], index: 4, kind: output, shape index: {}]
  %s5 = sld [smem:[#allocation0]]
  $region38: #{tpu_custom_call.1} parent=0
    _
  %s7 = ssub.s32 1, %s5
  %s8 = scalar_select 0, %s7, %s5
  $region1: #{tpu_custom_call.1} parent=0
    #allocation2 [shape = 'u8[2048]{0}', space=vmem, size = 0x800, scoped, tag = 'input window, operand 0, single buffered']
    #allocation3 [shape = 's32[1]{0}', space=sflag, size = 0x4, scoped, tag = 'scoped memory for tpu_custom_call.1']
    #allocation4 [shape = 's32[1]{0}', space=sflag, size = 0x4, scoped, tag = 'scoped memory for tpu_custom_call.1']
    #allocation5 [shape = 'u8[512]{0}', space=vmem, size = 0x400, scoped, tag = 'input window, operand 1, single buffered']
    #allocation6 [shape = 's32[1]{0}', space=sflag, size = 0x4, scoped, tag = 'scoped memory for tpu_custom_call.1']
    #allocation7 [shape = 'u8[65536]{0}', space=vmem, size = 0x10000, scoped, tag = 'input window, operand 3, single buffered']
    #allocation8 [shape = 'u8[2048]{0}', space=vmem, size = 0x800, scoped, tag = 'output window, operand 0, single buffered']
    %9 = vsyncpa [#allocation3], 0
    %10 = vsyncpa [#allocation6], 0
    %11 = vsyncpa [#allocation4], 0
    // Predicated region
    $region2: #{tpu_custom_call.1} parent=1 // pred_check
      _
    $region3: #{tpu_custom_call.1} parent=1 // pred_check_branch
      %13 = sbr.rel (0) target = $region5
    $region4: #{tpu_custom_call.1} parent=1 // pred_region
      %15 = vsyncadd [#allocation3], 0
      %s17 = sshll.u32 %s0, 4
      %s18 = int_to_ptr.hbm [resolvable:$true] %s17
      %s19 = sshll.u32 [#allocation2], 4
      %s20 = int_to_ptr.vmem [resolvable:$true] %s19
      %22 = dma.hbm_to_vmem [thread:$0]  %s18, 64, %s20, [#allocation3]
    $region5: #{tpu_custom_call.1} parent=1 // pred_fallthru
      _
    // Predicated region
    $region6: #{tpu_custom_call.1} parent=1 // pred_check
      _
    $region7: #{tpu_custom_call.1} parent=1 // pred_check_branch
      %24 = sbr.rel (0) target = $region9
    $region8: #{tpu_custom_call.1} parent=1 // pred_region
      %26 = vsyncadd [#allocation6], 0
      %s28 = sshll.u32 %s1, 4
      %s29 = int_to_ptr.hbm [resolvable:$true] %s28
      %s30 = sshll.u32 [#allocation5], 4
      %s31 = int_to_ptr.vmem [resolvable:$true] %s30
      %33 = dma.hbm_to_vmem [thread:$0]  %s29, 16, %s31, [#allocation6]
    $region9: #{tpu_custom_call.1} parent=1 // pred_fallthru
      _
    // Predicated region
    $region10: #{tpu_custom_call.1} parent=1 // pred_check
      _
    $region11: #{tpu_custom_call.1} parent=1 // pred_check_branch
      %35 = sbr.rel (0) target = $region13
    $region12: #{tpu_custom_call.1} parent=1 // pred_region
      _
    $region13: #{tpu_custom_call.1} parent=1 // pred_fallthru
      _
    // Predicated region
    $region14: #{tpu_custom_call.1} parent=1 // pred_check
      _
    $region15: #{tpu_custom_call.1} parent=1 // pred_check_branch
      %37 = sbr.rel (0) target = $region17
    $region16: #{tpu_custom_call.1} parent=1 // pred_region
      %39 = vsyncadd [#allocation6], 0
      %s40 = sshll.u32 %s3, 4
      %s41 = int_to_ptr.hbm [resolvable:$true] %s40
      %s42 = sshll.u32 [#allocation7], 4
      %s43 = int_to_ptr.vmem [resolvable:$true] %s42
      %48 = dma.hbm_to_vmem [thread:$0]  %s41, 2048, %s43, [#allocation6], 128, 128, 8
    $region17: #{tpu_custom_call.1} parent=1 // pred_fallthru
      _
    // Predicated region
    $region18: #{tpu_custom_call.1} parent=1 // pred_check
      _
    $region19: #{tpu_custom_call.1} parent=1 // pred_check_branch
      %50 = sbr.rel (0) target = $region21
    $region20: #{tpu_custom_call.1} parent=1 // pred_region
      %52 = dma.done [#allocation3], 64
    $region21: #{tpu_custom_call.1} parent=1 // pred_fallthru
      _
    // Predicated region
    $region22: #{tpu_custom_call.1} parent=1 // pred_check
      _
    $region23: #{tpu_custom_call.1} parent=1 // pred_check_branch
      %54 = sbr.rel (0) target = $region25
    $region24: #{tpu_custom_call.1} parent=1 // pred_region
      %56 = dma.done [#allocation6], 16
    $region25: #{tpu_custom_call.1} parent=1 // pred_fallthru
      _
    // Predicated region
    $region26: #{tpu_custom_call.1} parent=1 // pred_check
      _
    $region27: #{tpu_custom_call.1} parent=1 // pred_check_branch
      %58 = sbr.rel (0) target = $region29
    $region28: #{tpu_custom_call.1} parent=1 // pred_region
      %60 = dma.done [#allocation6], 2048
    $region29: #{tpu_custom_call.1} parent=1 // pred_fallthru
      _
    %v61 = vld [vmem:[#allocation2] sm:$0xf]
    %v62 = vld [vmem:[#allocation7] sm:$0xff]
    %v63 = vld [vmem:[#allocation7 + $0x8] sm:$0xff]
    %v64 = vld [vmem:[#allocation7 + $0x10] sm:$0xff]
    %v65 = vld [vmem:[#allocation7 + $0x18] sm:$0xff]
    %v66 = vld [vmem:[#allocation7 + $0x20] sm:$0xff]
    %v67 = vld [vmem:[#allocation7 + $0x28] sm:$0xff]
    %v68 = vld [vmem:[#allocation7 + $0x30] sm:$0xff]
    %v69 = vld [vmem:[#allocation7 + $0x38] sm:$0xff]
    %v70 = vld [vmem:[#allocation7 + $0x40] sm:$0xff]
    %v71 = vld [vmem:[#allocation7 + $0x48] sm:$0xff]
    %v72 = vld [vmem:[#allocation7 + $0x50] sm:$0xff]
    %v73 = vld [vmem:[#allocation7 + $0x58] sm:$0xff]
    %v74 = vld [vmem:[#allocation7 + $0x60] sm:$0xff]
    %v75 = vld [vmem:[#allocation7 + $0x68] sm:$0xff]
    %v76 = vld [vmem:[#allocation7 + $0x70] sm:$0xff]
    %v77 = vld [vmem:[#allocation7 + $0x78] sm:$0xff]
    %78 = vmatpush.msra.mxu0 %v77
    %79 = vmatpush.msra.mxu0 %v76
    %80 = vmatpush.msra.mxu0 %v75
    %81 = vmatpush.msra.mxu0 %v74
    %82 = vmatpush.msra.mxu0 %v73
    %83 = vmatpush.msra.mxu0 %v72
    %84 = vmatpush.msra.mxu0 %v71
    %85 = vmatpush.msra.mxu0 %v70
    %86 = vmatpush.msra.mxu0 %v69
    %87 = vmatpush.msra.mxu0 %v68
    %88 = vmatpush.msra.mxu0 %v67
    %89 = vmatpush.msra.mxu0 %v66
    %90 = vmatpush.msra.mxu0 %v65
    %91 = vmatpush.msra.mxu0 %v64
    %92 = vmatpush.msra.mxu0 %v63
    %93 = vmatpush.msra.mxu0 %v62
    %94 = vmatmul.f32.gmra.mxu0 %v61
    %v95 = vpop.f32.mrf.mxu0
    %v96 = vadd.f32 0.0, %v95
    %97 = vdwg.mxu0
    %v98 = vmul.f32 %v61, %v61
    %99 = vmatpush.msra.mxu0 %v77
    %100 = vmatpush.msra.mxu0 %v76
    %101 = vmatpush.msra.mxu0 %v75
    %102 = vmatpush.msra.mxu0 %v74
    %103 = vmatpush.msra.mxu0 %v73
    %104 = vmatpush.msra.mxu0 %v72
    %105 = vmatpush.msra.mxu0 %v71
    %106 = vmatpush.msra.mxu0 %v70
    %107 = vmatpush.msra.mxu0 %v69
    %108 = vmatpush.msra.mxu0 %v68
    %109 = vmatpush.msra.mxu0 %v67
    %110 = vmatpush.msra.mxu0 %v66
    %111 = vmatpush.msra.mxu0 %v65
    %112 = vmatpush.msra.mxu0 %v64
    %113 = vmatpush.msra.mxu0 %v63
    %114 = vmatpush.msra.mxu0 %v62
    %115 = vmatmul.f32.gmra.mxu0 %v98
    %v116 = vpop.f32.mrf.mxu0
    %v117 = vadd.f32 0.0, %v116
    %118 = vdwg.mxu0
    %v119 = vmul.f32 %v96, 0.03125
    %v120 = vmul.f32 %v96, %v119
    %v121 = vsub.f32 %v117, %v120
    %v122 = vmul.f32 %v121, 0.032258064
    %v123 = vadd.f32 %v122, 1e-12
    %v124 = vrsqrt.pop %v123
    %v125 = vmul.f32 %v124, %v123
    %v126 = vmul.f32 %v125, %v124
    %v127 = vmul.f32 0.5, %v126
    %v128 = vsub.f32 1.5, %v127
    %v129 = vmul.f32 %v124, %v128
    %vm130 = vweird.f32 %v123
    %vm131 = vweird.f32 %v124
    %vm132 = vmor %vm130, %vm131
    %v133 = vsel %vm132, %v124, %v129
    %v134 = vsub.f32 %v61, %v119
    %v135 = vmul.f32 %v134, %v133
    %v136 = vld [vmem:[#allocation5] sm:$0x1]
    %v138 = vperm.slane %v136, 0
    %v140 = vmul.f32 %v135, %v138
    %v141 = vld [vmem:[%s2] sm:$0x1]
    %v143 = vperm.slane %v141, 0
    %v145 = vadd.f32 %v140, %v143
    %146 = vst [vmem:[#allocation8] sm:$0xf] %v145
    // Predicated region
    $region30: #{tpu_custom_call.1} parent=1 // pred_check
      _
    $region31: #{tpu_custom_call.1} parent=1 // pred_check_branch
      %148 = sbr.rel (0) target = $region33
    $region32: #{tpu_custom_call.1} parent=1 // pred_region
      %150 = vsyncadd [#allocation4], 0
      %s152 = sshll.u32 [#allocation8], 4
      %s153 = int_to_ptr.vmem [resolvable:$true] %s152
      %s154 = sshll.u32 %s4, 4
      %s155 = int_to_ptr.hbm [resolvable:$true] %s154
      %157 = dma.vmem_to_hbm [thread:$0]  %s153, 64, %s155, [#allocation4]
    $region33: #{tpu_custom_call.1} parent=1 // pred_fallthru
      _
    // Predicated region
    $region34: #{tpu_custom_call.1} parent=1 // pred_check
      _
    $region35: #{tpu_custom_call.1} parent=1 // pred_check_branch
      %159 = sbr.rel (0) target = $region37
    $region36: #{tpu_custom_call.1} parent=1 // pred_region
      %161 = dma.done [#allocation4], 64
    $region37: #{tpu_custom_call.1} parent=1 // pred_fallthru
      _
    %162 = vsyncpa [#allocation3], 1
    %163 = vsyncpa [#allocation6], 1
    %164 = vsyncpa [#allocation4], 1

</llo_original>
